<compile_context>
chip_gen: v6e
topology: v6e:2x2x1
jax: 0.10.0
libtpu: 0.0.40
codegen_flags: <defaults>
</compile_context>

<pallas_src>
import math

import jax
import jax.numpy as jnp
from jax.experimental import pallas as pl
from jax.experimental.pallas import tpu as pltpu


def _round_up(n, m):
    return (n + m - 1) // m * m


def _residual_block_kernel(x_ref, w1_ref, b1_ref, w2_ref, b2_ref, o_ref):
    """One batch-tile of: out = fc2(relu(fc1(x))) + x (feature dims padded)."""
    x = x_ref[...]                                            # (TB, Dp) native dtype
    # fc1 on the MXU: native-dtype operands, f32 accumulator.
    h = jnp.dot(x, w1_ref[...], preferred_element_type=jnp.float32)
    # Bias add + ReLU in f32 on the VPU.
    h = jnp.maximum(h + b1_ref[...].astype(jnp.float32), 0.0)
    # fc2: cast the f32 intermediate back to the weight dtype for the MXU.
    y = jnp.dot(h.astype(w2_ref.dtype), w2_ref[...],
                preferred_element_type=jnp.float32)
    # Bias + residual in f32, single downcast on store.
    y = y + b2_ref[...].astype(jnp.float32) + x.astype(jnp.float32)
    o_ref[...] = y.astype(o_ref.dtype)


def residual_block(x, w1, b1, w2, b2, *, tile_b=256, lane=128):
    """x: (B, D); w1: (D, H); b1: (H,); w2: (H, D); b2: (D,)."""
    B, D = x.shape
    Din, H = w1.shape
    assert Din == D and w2.shape == (H, D) and b1.shape == (H,) and b2.shape == (D,)

    # Lane-dense padded feature dims (multiples of 128).
    Dp = _round_up(D, lane)
    Hp = _round_up(H, lane)

    # Batch tile: large (fills MXU M dim), multiple of 8 sublanes, capped by B.
    tb = min(tile_b, _round_up(B, 8))
    tb = _round_up(tb, 8)
    Bp = _round_up(B, tb)

    # Zero-pad: padded lanes of x / W / b are zero, so padded output columns
    # stay exactly zero and are sliced away below.
    xp = jnp.pad(x, ((0, Bp - B), (0, Dp - D)))
    w1p = jnp.pad(w1, ((0, Dp - D), (0, Hp - H)))
    b1p = jnp.pad(b1, (0, Hp - H)).reshape(1, Hp)
    w2p = jnp.pad(w2, ((0, Hp - H), (0, Dp - D)))
    b2p = jnp.pad(b2, (0, Dp - D)).reshape(1, Dp)

    bytes_per = jnp.dtype(x.dtype).itemsize
    cost = pl.CostEstimate(
        flops=2 * Bp * (Dp * Hp + Hp * Dp),
        transcendentals=0,
        bytes_accessed=(xp.size + w1p.size + b1p.size + w2p.size + b2p.size
                        + Bp * Dp) * bytes_per,
    )

    grid = (Bp // tb,)
    out = pl.pallas_call(
        _residual_block_kernel,
        out_shape=jax.ShapeDtypeStruct((Bp, Dp), x.dtype),
        grid_spec=pltpu.PrefetchScalarGridSpec(
            num_scalar_prefetch=0,
            grid=grid,
            in_specs=[
                pl.BlockSpec((tb, Dp), lambda i: (i, 0)),   # x tile
                pl.BlockSpec((Dp, Hp), lambda i: (0, 0)),   # W1 (resident)
                pl.BlockSpec((1, Hp), lambda i: (0, 0)),    # b1 (resident)
                pl.BlockSpec((Hp, Dp), lambda i: (0, 0)),   # W2 (resident)
                pl.BlockSpec((1, Dp), lambda i: (0, 0)),    # b2 (resident)
            ],
            out_specs=pl.BlockSpec((tb, Dp), lambda i: (i, 0)),
        ),
        compiler_params=pltpu.CompilerParams(
            dimension_semantics=("parallel",)),
        cost_estimate=cost,
    )(xp, w1p, b1p, w2p, b2p)

    return out[:B, :D]


def _init_linear_params(key, in_features, out_features, dtype=jnp.float32):
    """PyTorch-style init U(-1/sqrt(fan_in), 1/sqrt(fan_in)); weight already
    transposed to (in_features, out_features)."""
    kw, kb = jax.random.split(key)
    bound = 1.0 / math.sqrt(in_features)
    w = jax.random.uniform(kw, (in_features, out_features), dtype,
                           minval=-bound, maxval=bound)
    b = jax.random.uniform(kb, (out_features,), dtype,
                           minval=-bound, maxval=bound)
    return w, b


def residual_block_ref(x, w1, b1, w2, b2):
    """Pure-JAX reference of the PyTorch forward."""
    h = jnp.maximum(x @ w1 + b1, 0.0)
    return h @ w2 + b2 + x


if __name__ == "__main__":
    # Shapes consistent with the module: input_size=32, hidden=64.  Batch 512
    # gives a 2-step grid at tile_b=256 (both v7x TensorCores busy) while
    # staying tiny (< 1 ms end-to-end).
    B, INPUT_SIZE, HIDDEN_SIZE = 512, 32, 64

    key = jax.random.PRNGKey(0)
    kx, k1, k2 = jax.random.split(key, 3)

    x = jax.random.normal(kx, (B, INPUT_SIZE), jnp.float32)
    w1, b1 = _init_linear_params(k1, INPUT_SIZE, HIDDEN_SIZE)   # fc1
    w2, b2 = _init_linear_params(k2, HIDDEN_SIZE, INPUT_SIZE)   # fc2

    out = residual_block(x, w1, b1, w2, b2)
    out = jax.block_until_ready(out)

    ref = residual_block_ref(x, w1, b1, w2, b2)
    assert out.shape == (B, INPUT_SIZE)
    assert jnp.allclose(out, ref, atol=1e-5, rtol=1e-5), "mismatch vs JAX reference"

    print("KERNEL_OK")
</pallas_src>

<mosaic_0001>
module attributes {stable_mosaic.version = 11 : i64} {
  func.func @_residual_block_kernel(%arg0: i32, %arg1: memref<256x128xf32, #tpu.memory_space<vmem>>, %arg2: memref<128x128xf32, #tpu.memory_space<vmem>>, %arg3: memref<1x128xf32, #tpu.memory_space<vmem>>, %arg4: memref<128x128xf32, #tpu.memory_space<vmem>>, %arg5: memref<1x128xf32, #tpu.memory_space<vmem>>, %arg6: memref<256x128xf32, #tpu.memory_space<vmem>>) attributes {dimension_semantics = [#tpu.dimension_semantics<parallel>], iteration_bounds = array<i64: 2>, scalar_prefetch = 0 : i64, scratch_operands = 0 : i64, tpu.core_type = #tpu.core_type<tc>, window_params = [{transform_indices = @transform_0, window_bounds = array<i64: 256, 128>}, {pipeline_mode = #tpu.pipeline_mode<synchronous>, transform_indices = @transform_1, window_bounds = array<i64: 128, 128>}, {pipeline_mode = #tpu.pipeline_mode<synchronous>, transform_indices = @transform_2, window_bounds = array<i64: 1, 128>}, {pipeline_mode = #tpu.pipeline_mode<synchronous>, transform_indices = @transform_3, window_bounds = array<i64: 128, 128>}, {pipeline_mode = #tpu.pipeline_mode<synchronous>, transform_indices = @transform_4, window_bounds = array<i64: 1, 128>}, {transform_indices = @transform_5, window_bounds = array<i64: 256, 128>}]} {
    %c0 = arith.constant 0 : index
    %c0_0 = arith.constant 0 : index
    %0 = vector.load %arg1[%c0, %c0_0] : memref<256x128xf32, #tpu.memory_space<vmem>>, vector<256x128xf32>
    %c0_1 = arith.constant 0 : index
    %c0_2 = arith.constant 0 : index
    %1 = vector.load %arg2[%c0_1, %c0_2] : memref<128x128xf32, #tpu.memory_space<vmem>>, vector<128x128xf32>
    %cst = arith.constant dense<0.000000e+00> : vector<256x128xf32>
    %2 = tpu.matmul %0, %1, %cst {dimension_numbers = #tpu.dot_dimension_numbers<[1], [0], [0], [1], [0, 0, 1, 1], [], []>} : vector<256x128xf32>, vector<128x128xf32>, vector<256x128xf32> -> vector<256x128xf32>
    %c0_3 = arith.constant 0 : index
    %c0_4 = arith.constant 0 : index
    %3 = vector.load %arg3[%c0_3, %c0_4] : memref<1x128xf32, #tpu.memory_space<vmem>>, vector<1x128xf32>
    %4 = vector.broadcast %3 : vector<1x128xf32> to vector<256x128xf32>
    %5 = arith.addf %2, %4 : vector<256x128xf32>
    %cst_5 = arith.constant 0.000000e+00 : f32
    %6 = vector.broadcast %cst_5 : f32 to vector<256x128xf32>
    %7 = arith.maximumf %5, %6 : vector<256x128xf32>
    %c0_6 = arith.constant 0 : index
    %c0_7 = arith.constant 0 : index
    %8 = vector.load %arg4[%c0_6, %c0_7] : memref<128x128xf32, #tpu.memory_space<vmem>>, vector<128x128xf32>
    %cst_8 = arith.constant dense<0.000000e+00> : vector<256x128xf32>
    %9 = tpu.matmul %7, %8, %cst_8 {dimension_numbers = #tpu.dot_dimension_numbers<[1], [0], [0], [1], [0, 0, 1, 1], [], []>} : vector<256x128xf32>, vector<128x128xf32>, vector<256x128xf32> -> vector<256x128xf32>
    %c0_9 = arith.constant 0 : index
    %c0_10 = arith.constant 0 : index
    %10 = vector.load %arg5[%c0_9, %c0_10] : memref<1x128xf32, #tpu.memory_space<vmem>>, vector<1x128xf32>
    %11 = vector.broadcast %10 : vector<1x128xf32> to vector<256x128xf32>
    %12 = arith.addf %9, %11 : vector<256x128xf32>
    %13 = arith.addf %12, %0 : vector<256x128xf32>
    %c0_11 = arith.constant 0 : index
    %c0_12 = arith.constant 0 : index
    %14 = vector.load %arg6[%c0_11, %c0_12] : memref<256x128xf32, #tpu.memory_space<vmem>>, vector<256x128xf32>
    tpu.vector_store %arg6[%c0_11, %c0_12], %13 {strides = array<i32>} : memref<256x128xf32, #tpu.memory_space<vmem>>, vector<256x128xf32>,
    return
  }
  func.func @transform_0(%arg0: i32) -> (i32, i32) {
    %c0_i32 = arith.constant 0 : i32
    %c0_i32_0 = arith.constant 0 : i32
    return %arg0, %c0_i32 : i32, i32
  }
  func.func @transform_1(%arg0: i32) -> (i32, i32) {
    %c0_i32 = arith.constant 0 : i32
    %c0_i32_0 = arith.constant 0 : i32
    %c0_i32_1 = arith.constant 0 : i32
    return %c0_i32, %c0_i32_0 : i32, i32
  }
  func.func @transform_2(%arg0: i32) -> (i32, i32) {
    %c0_i32 = arith.constant 0 : i32
    %c0_i32_0 = arith.constant 0 : i32
    %c0_i32_1 = arith.constant 0 : i32
    return %c0_i32, %c0_i32_0 : i32, i32
  }
  func.func @transform_3(%arg0: i32) -> (i32, i32) {
    %c0_i32 = arith.constant 0 : i32
    %c0_i32_0 = arith.constant 0 : i32
    %c0_i32_1 = arith.constant 0 : i32
    return %c0_i32, %c0_i32_0 : i32, i32
  }
  func.func @transform_4(%arg0: i32) -> (i32, i32) {
    %c0_i32 = arith.constant 0 : i32
    %c0_i32_0 = arith.constant 0 : i32
    %c0_i32_1 = arith.constant 0 : i32
    return %c0_i32, %c0_i32_0 : i32, i32
  }
  func.func @transform_5(%arg0: i32) -> (i32, i32) {
    %c0_i32 = arith.constant 0 : i32
    %c0_i32_0 = arith.constant 0 : i32
    return %arg0, %c0_i32 : i32, i32
  }
}

</mosaic_0001>

<llo_original>
// kernel: tpu_custom_call.1
$region0: #{tpu_custom_call.1}
  #allocation0 [shape = 'u32[]', space=smem, size = 0x4, offset = 0x4, fixed_abs, tag = 'smem constant byte address 0x4 - core index']
  #allocation1 [shape = 'u32[144,128]{1,0:T(1,128)}', space=vmem, size = 0x12000, scoped, tag = 'internal scratch']
  %s0 = inlined_call_operand.hbm [shape: f32[512,128], index: 0, kind: input, shape index: {}]
  %s1 = inlined_call_operand.hbm [shape: f32[128,128], index: 1, kind: input, shape index: {}]
  %s2 = inlined_call_operand.vmem [shape: f32[1,128], index: 2, kind: input, shape index: {}]
  %s3 = inlined_call_operand.hbm [shape: f32[128,128], index: 3, kind: input, shape index: {}]
  %s4 = inlined_call_operand.vmem [shape: f32[1,128], index: 4, kind: input, shape index: {}]
  %s5 = inlined_call_operand.hbm [shape: f32[512,128], index: 5, kind: output, shape index: {}]
  %s6 = sld [smem:[#allocation0]]
  $region65: #{tpu_custom_call.1} parent=0
    _
  %s8 = ssub.s32 1, %s6
  %s9 = scalar_select 0, %s8, %s6
  $region1: #{tpu_custom_call.1} parent=0
    #allocation2 [shape = 'u8[262144]{0}', space=vmem, size = 0x40000, scoped, tag = 'input window, operand 0']
    #allocation3 [shape = 's32[2]{0}', space=sflag, size = 0x8, scoped, tag = 'scoped memory for tpu_custom_call.1']
    #allocation4 [shape = 's32[2]{0}', space=sflag, size = 0x8, scoped, tag = 'scoped memory for tpu_custom_call.1']
    #allocation5 [shape = 'u8[65536]{0}', space=vmem, size = 0x10000, scoped, tag = 'input window, operand 1, single buffered']
    #allocation6 [shape = 's32[1]{0}', space=sflag, size = 0x4, scoped, tag = 'scoped memory for tpu_custom_call.1']
    #allocation7 [shape = 'u8[65536]{0}', space=vmem, size = 0x10000, scoped, tag = 'input window, operand 3, single buffered']
    #allocation8 [shape = 'u8[262144]{0}', space=vmem, size = 0x40000, scoped, tag = 'output window, operand 0']
    %10 = vsyncpa [#allocation3], 0
    %s11 = scalar_lea.sflag [#allocation3], 1
    %12 = vsyncpa %s11, 0
    %13 = vsyncpa [#allocation6], 0
    %14 = vsyncpa [#allocation4], 0
    %s15 = scalar_lea.sflag [#allocation4], 1
    %16 = vsyncpa %s15, 0
    loop: start=0, step=1, limit=4
    $region2: #{tpu_custom_call.1} parent=1 // loop_pre_header
      _
    $region3: #{tpu_custom_call.1} parent=1 // loop_header
      %s18 = sphi 0, %s22
      %p19 = scmp.ge.s32.totalorder %s18, 4
      %s28 = sphi 0, %s30
      %s31 = sphi 0, %s28
      %s32 = sphi 0, %s31
      %s48 = sphi 0, %s32
      %s52 = sphi 0, %s52
      %s54 = sphi 0, %s52
      %s55 = sphi 0, %s54
      %s69 = sphi 0, %s55
      %s73 = sphi 0, %s73
      %s75 = sphi 0, %s73
      %s76 = sphi 0, %s75
      %s90 = sphi 0, %s76
      %s94 = sphi 0, %s94
      %s96 = sphi 0, %s94
      %s97 = sphi 0, %s96
      %s111 = sphi 0, %s97
      %s115 = sphi 0, %s115
      %s117 = sphi 0, %s115
      %s118 = sphi 0, %s117
      %s132 = sphi 0, %s118
      %s138 = sphi 0, %s140
      %s141 = sphi 0, %s138
      %s142 = sphi 0, %s141
      %s158 = sphi 0, %s142
    $region4: #{tpu_custom_call.1} parent=1 // loop_header_branch
      %21 = sbr.rel (%p19) target = $region8
    $region5: #{tpu_custom_call.1} parent=1 // loop_body
      %s23 = ssub.s32 %s18, 1
      %s24 = ssub.s32 %s18, 2
      %s25 = sadd.s32 %s18, 1
      %s26 = ssub.s32 %s18, %s25
      %p27 = scmp.eq.s32.totalorder %s26, 0
      %s29 = sadd.s32 %s28, 1
      %s30 = scalar_select %p27, %s28, %s29
      %p33 = pneg %p27
      %p34 = scmp.eq.s32.totalorder %s18, 1
      %p35 = por %p33, %p34
      %p36 = scmp.ne.s32.totalorder %s28, %s31
      %p37 = scmp.eq.s32.totalorder %s18, 0
      %p38 = por %p36, %p37
      %p39 = scmp.ne.s32.totalorder %s28, %s31
      %p40 = scmp.eq.s32.totalorder %s23, 1
      %p41 = por %p39, %p40
      %p42 = scmp.ne.s32.totalorder %s31, %s32
      %p43 = scmp.eq.s32.totalorder %s23, 0
      %p44 = por %p42, %p43
      %p45 = scmp.ne.s32.totalorder %s31, %s32
      %p46 = scmp.eq.s32.totalorder %s24, 1
      %p47 = por %p45, %p46
      %p49 = scmp.ne.s32.totalorder %s32, %s48
      %p50 = scmp.eq.s32.totalorder %s24, 0
      %p51 = por %p49, %p50
      %s53 = sadd.s32 %s52, 1
      %p56 = scmp.eq.s32.totalorder %s18, 1
      %p57 = scmp.ne.s32.totalorder %s52, %s54
      %p58 = scmp.eq.s32.totalorder %s18, 0
      %p59 = por %p57, %p58
      %p60 = scmp.ne.s32.totalorder %s52, %s54
      %p61 = scmp.eq.s32.totalorder %s23, 1
      %p62 = por %p60, %p61
      %p63 = scmp.ne.s32.totalorder %s54, %s55
      %p64 = scmp.eq.s32.totalorder %s23, 0
      %p65 = por %p63, %p64
      %p66 = scmp.ne.s32.totalorder %s54, %s55
      %p67 = scmp.eq.s32.totalorder %s24, 1
      %p68 = por %p66, %p67
      %p70 = scmp.ne.s32.totalorder %s55, %s69
      %p71 = scmp.eq.s32.totalorder %s24, 0
      %p72 = por %p70, %p71
      %s74 = sadd.s32 %s73, 1
      %p77 = scmp.eq.s32.totalorder %s18, 1
      %p78 = scmp.ne.s32.totalorder %s73, %s75
      %p79 = scmp.eq.s32.totalorder %s18, 0
      %p80 = por %p78, %p79
      %p81 = scmp.ne.s32.totalorder %s73, %s75
      %p82 = scmp.eq.s32.totalorder %s23, 1
      %p83 = por %p81, %p82
      %p84 = scmp.ne.s32.totalorder %s75, %s76
      %p85 = scmp.eq.s32.totalorder %s23, 0
      %p86 = por %p84, %p85
      %p87 = scmp.ne.s32.totalorder %s75, %s76
      %p88 = scmp.eq.s32.totalorder %s24, 1
      %p89 = por %p87, %p88
      %p91 = scmp.ne.s32.totalorder %s76, %s90
      %p92 = scmp.eq.s32.totalorder %s24, 0
      %p93 = por %p91, %p92
      %s95 = sadd.s32 %s94, 1
      %p98 = scmp.eq.s32.totalorder %s18, 1
      %p99 = scmp.ne.s32.totalorder %s94, %s96
      %p100 = scmp.eq.s32.totalorder %s18, 0
      %p101 = por %p99, %p100
      %p102 = scmp.ne.s32.totalorder %s94, %s96
      %p103 = scmp.eq.s32.totalorder %s23, 1
      %p104 = por %p102, %p103
      %p105 = scmp.ne.s32.totalorder %s96, %s97
      %p106 = scmp.eq.s32.totalorder %s23, 0
      %p107 = por %p105, %p106
      %p108 = scmp.ne.s32.totalorder %s96, %s97
      %p109 = scmp.eq.s32.totalorder %s24, 1
      %p110 = por %p108, %p109
      %p112 = scmp.ne.s32.totalorder %s97, %s111
      %p113 = scmp.eq.s32.totalorder %s24, 0
      %p114 = por %p112, %p113
      %s116 = sadd.s32 %s115, 1
      %p119 = scmp.eq.s32.totalorder %s18, 1
      %p120 = scmp.ne.s32.totalorder %s115, %s117
      %p121 = scmp.eq.s32.totalorder %s18, 0
      %p122 = por %p120, %p121
      %p123 = scmp.ne.s32.totalorder %s115, %s117
      %p124 = scmp.eq.s32.totalorder %s23, 1
      %p125 = por %p123, %p124
      %p126 = scmp.ne.s32.totalorder %s117, %s118
      %p127 = scmp.eq.s32.totalorder %s23, 0
      %p128 = por %p126, %p127
      %p129 = scmp.ne.s32.totalorder %s117, %s118
      %p130 = scmp.eq.s32.totalorder %s24, 1
      %p131 = por %p129, %p130
      %p133 = scmp.ne.s32.totalorder %s118, %s132
      %p134 = scmp.eq.s32.totalorder %s24, 0
      %p135 = por %p133, %p134
      %s136 = ssub.s32 %s18, %s25
      %p137 = scmp.eq.s32.totalorder %s136, 0
      %s139 = sadd.s32 %s138, 1
      %s140 = scalar_select %p137, %s138, %s139
      %p143 = pneg %p137
      %p144 = scmp.eq.s32.totalorder %s18, 1
      %p145 = por %p143, %p144
      %p146 = scmp.ne.s32.totalorder %s138, %s141
      %p147 = scmp.eq.s32.totalorder %s18, 0
      %p148 = por %p146, %p147
      %p149 = scmp.ne.s32.totalorder %s138, %s141
      %p150 = scmp.eq.s32.totalorder %s23, 1
      %p151 = por %p149, %p150
      %p152 = scmp.ne.s32.totalorder %s141, %s142
      %p153 = scmp.eq.s32.totalorder %s23, 0
      %p154 = por %p152, %p153
      %p155 = scmp.ne.s32.totalorder %s141, %s142
      %p156 = scmp.eq.s32.totalorder %s24, 1
      %p157 = por %p155, %p156
      %p159 = scmp.ne.s32.totalorder %s142, %s158
      %p160 = scmp.eq.s32.totalorder %s24, 0
      %p161 = por %p159, %p160
      %p162 = scmp.le.s32.totalorder 1, %s18
      %p163 = scmp.lt.s32.totalorder %s18, 3
      %p164 = pnand %p162, %p163
      %p165 = pneg %p164
      // Predicated region
      $region9: #{tpu_custom_call.1} parent=5 // pred_check
        _
      $region10: #{tpu_custom_call.1} parent=5 // pred_check_branch
        %167 = sbr.rel (%p164) target = $region12
      $region11: #{tpu_custom_call.1} parent=5 // pred_region
        %s168 = ssub.s32 %s18, 1
        // Predicated region
        $region13: #{tpu_custom_call.1} parent=11 // pred_check
          %p169 = pneg %p65
        $region14: #{tpu_custom_call.1} parent=11 // pred_check_branch
          %171 = sbr.rel (%p169) target = $region16
        $region15: #{tpu_custom_call.1} parent=11 // pred_region
          %s173 = ssub.s32 2048, 2048
          %174 = vsyncadd [#allocation6], %s173
          %s175 = sshll.u32 [#allocation5], 4
          %s176 = int_to_ptr.vmem [resolvable:$true] %s175
          %181 = dma.hbm_to_vmem [thread:$0]  %s1, 2048, %s176, [#allocation6], 128, 128, 8
        $region16: #{tpu_custom_call.1} parent=11 // pred_fallthru
          _
        // Predicated region
        $region17: #{tpu_custom_call.1} parent=11 // pred_check
          %p182 = pneg %p86
        $region18: #{tpu_custom_call.1} parent=11 // pred_check_branch
          %184 = sbr.rel (%p182) target = $region20
        $region19: #{tpu_custom_call.1} parent=11 // pred_region
          _
        $region20: #{tpu_custom_call.1} parent=11 // pred_fallthru
          _
        // Predicated region
        $region21: #{tpu_custom_call.1} parent=11 // pred_check
          %p185 = pneg %p107
        $region22: #{tpu_custom_call.1} parent=11 // pred_check_branch
          %187 = sbr.rel (%p185) target = $region24
        $region23: #{tpu_custom_call.1} parent=11 // pred_region
          %s189 = ssub.s32 2048, 2048
          %190 = vsyncadd [#allocation6], %s189
          %s191 = sshll.u32 [#allocation7], 4
          %s192 = int_to_ptr.vmem [resolvable:$true] %s191
          %197 = dma.hbm_to_vmem [thread:$0]  %s3, 2048, %s192, [#allocation6], 128, 128, 8
        $region24: #{tpu_custom_call.1} parent=11 // pred_fallthru
          _
        // Predicated region
        $region25: #{tpu_custom_call.1} parent=11 // pred_check
          %p198 = pneg %p128
        $region26: #{tpu_custom_call.1} parent=11 // pred_check_branch
          %200 = sbr.rel (%p198) target = $region28
        $region27: #{tpu_custom_call.1} parent=11 // pred_region
          _
        $region28: #{tpu_custom_call.1} parent=11 // pred_fallthru
          _
      $region12: #{tpu_custom_call.1} parent=5 // pred_fallthru
        _
      %p201 = scmp.lt.s32.totalorder %s18, 2
      // Predicated region
      $region29: #{tpu_custom_call.1} parent=5 // pred_check
        %p202 = pneg %p201
      $region30: #{tpu_custom_call.1} parent=5 // pred_check_branch
        %204 = sbr.rel (%p202) target = $region32
      $region31: #{tpu_custom_call.1} parent=5 // pred_region
        // Predicated region
        $region33: #{tpu_custom_call.1} parent=31 // pred_check
          %p205 = pneg %p38
        $region34: #{tpu_custom_call.1} parent=31 // pred_check_branch
          %207 = sbr.rel (%p205) target = $region36
        $region35: #{tpu_custom_call.1} parent=31 // pred_region
          %s208 = sand.u32 %s28, 1
          %s209 = scalar_lea.sflag [#allocation3], %s208
          %s210 = sand.u32 %s28, 1
          %s211 = smul.addr %s210, 256
          %s212 = scalar_lea.vmem [#allocation2], %s211
          %s213 = smul.u32 32, %s18
          %s215 = ssub.s32 4096, 4096
          %216 = vsyncadd %s209, %s215
          %s217 = smul.addr %s213, 128
          %s218 = scalar_lea.hbm %s0, %s217
          %s219 = sshll.u32 %s212, 4
          %s220 = int_to_ptr.vmem [resolvable:$true] %s219
          %225 = dma.hbm_to_vmem [thread:$0]  %s218, 4096, %s220, %s209, 128, 128, 8
        $region36: #{tpu_custom_call.1} parent=31 // pred_fallthru
          _
      $region32: #{tpu_custom_call.1} parent=5 // pred_fallthru
        _
      %p226 = scmp.le.s32.totalorder 1, %s18
      %p227 = scmp.lt.s32.totalorder %s18, 3
      %p228 = pnand %p226, %p227
      %p229 = pneg %p228
      // Predicated region
      $region37: #{tpu_custom_call.1} parent=5 // pred_check
        _
      $region38: #{tpu_custom_call.1} parent=5 // pred_check_branch
        %231 = sbr.rel (%p228) target = $region40
      $region39: #{tpu_custom_call.1} parent=5 // pred_region
        %s232 = ssub.s32 %s18, 1
        %s233 = sand.u32 %s31, 1
        %s234 = scalar_lea.sflag [#allocation3], %s233
        %s235 = sand.u32 %s31, 1
        %s236 = smul.addr %s235, 256
        %s237 = scalar_lea.vmem [#allocation2], %s236
        // Predicated region
        $region41: #{tpu_custom_call.1} parent=39 // pred_check
          %p238 = pneg %p44
        $region42: #{tpu_custom_call.1} parent=39 // pred_check_branch
          %240 = sbr.rel (%p238) target = $region44
        $region43: #{tpu_custom_call.1} parent=39 // pred_region
          %241 = dma.done %s234, 4096
        $region44: #{tpu_custom_call.1} parent=39 // pred_fallthru
          _
        // Predicated region
        $region45: #{tpu_custom_call.1} parent=39 // pred_check
          %p242 = pneg %p65
        $region46: #{tpu_custom_call.1} parent=39 // pred_check_branch
          %244 = sbr.rel (%p242) target = $region48
        $region47: #{tpu_custom_call.1} parent=39 // pred_region
          %245 = dma.done [#allocation6], 2048
        $region48: #{tpu_custom_call.1} parent=39 // pred_fallthru
          _
        // Predicated region
        $region49: #{tpu_custom_call.1} parent=39 // pred_check
          %p246 = pneg %p107
        $region50: #{tpu_custom_call.1} parent=39 // pred_check_branch
          %248 = sbr.rel (%p246) target = $region52
        $region51: #{tpu_custom_call.1} parent=39 // pred_region
          %249 = dma.done [#allocation6], 2048
        $region52: #{tpu_custom_call.1} parent=39 // pred_fallthru
          _
        %s250 = sand.u32 %s31, 1
        %s251 = scalar_lea.sflag [#allocation3], %s250
        %s252 = sand.u32 %s31, 1
        %s253 = smul.addr %s252, 256
        %s254 = scalar_lea.vmem [#allocation2], %s253
        %p255 = pneg %p44
        %p256 = pneg %p41
        %p257 = pneg %p65
        %p258 = pneg %p62
        %p259 = pneg %p86
        %p260 = pneg %p83
        %p261 = pneg %p107
        %p262 = pneg %p104
        %p263 = pneg %p128
        %p264 = pneg %p125
        %p265 = pneg %p154
        %p266 = pneg %p151
        %s267 = sand.u32 %s141, 1
        %s268 = scalar_lea.sflag [#allocation4], %s267
        %s269 = sand.u32 %s141, 1
        %s270 = smul.addr %s269, 256
        %s271 = scalar_lea.vmem [#allocation8], %s270
        %s272 = smul.u32 32, %s23
        %s273 = smul.u32 32, %s23
        %v274 = vld [vmem:[%s237] sm:$0xff]
        %v275 = vld [vmem:[%s237 + $0x8] sm:$0xff]
        %v276 = vld [vmem:[%s237 + $0x10] sm:$0xff]
        %v277 = vld [vmem:[%s237 + $0x18] sm:$0xff]
        %v278 = vld [vmem:[%s237 + $0x20] sm:$0xff]
        %v279 = vld [vmem:[%s237 + $0x28] sm:$0xff]
        %v280 = vld [vmem:[%s237 + $0x30] sm:$0xff]
        %v281 = vld [vmem:[%s237 + $0x38] sm:$0xff]
        %v282 = vld [vmem:[%s237 + $0x40] sm:$0xff]
        %v283 = vld [vmem:[%s237 + $0x48] sm:$0xff]
        %v284 = vld [vmem:[%s237 + $0x50] sm:$0xff]
        %v285 = vld [vmem:[%s237 + $0x58] sm:$0xff]
        %v286 = vld [vmem:[%s237 + $0x60] sm:$0xff]
        %v287 = vld [vmem:[%s237 + $0x68] sm:$0xff]
        %v288 = vld [vmem:[%s237 + $0x70] sm:$0xff]
        %v289 = vld [vmem:[%s237 + $0x78] sm:$0xff]
        %v290 = vld [vmem:[%s237 + $0x80] sm:$0xff]
        %v291 = vld [vmem:[%s237 + $0x88] sm:$0xff]
        %v292 = vld [vmem:[%s237 + $0x90] sm:$0xff]
        %v293 = vld [vmem:[%s237 + $0x98] sm:$0xff]
        %v294 = vld [vmem:[%s237 + $0xa0] sm:$0xff]
        %v295 = vld [vmem:[%s237 + $0xa8] sm:$0xff]
        %v296 = vld [vmem:[%s237 + $0xb0] sm:$0xff]
        %v297 = vld [vmem:[%s237 + $0xb8] sm:$0xff]
        %v298 = vld [vmem:[%s237 + $0xc0] sm:$0xff]
        %v299 = vld [vmem:[%s237 + $0xc8] sm:$0xff]
        %v300 = vld [vmem:[%s237 + $0xd0] sm:$0xff]
        %v301 = vld [vmem:[%s237 + $0xd8] sm:$0xff]
        %v302 = vld [vmem:[%s237 + $0xe0] sm:$0xff]
        %v303 = vld [vmem:[%s237 + $0xe8] sm:$0xff]
        %v304 = vld [vmem:[%s237 + $0xf0] sm:$0xff]
        %v305 = vld [vmem:[%s237 + $0xf8] sm:$0xff]
        %v306 = vld [vmem:[#allocation5] sm:$0xff]
        %v307 = vld [vmem:[#allocation5 + $0x8] sm:$0xff]
        %v308 = vld [vmem:[#allocation5 + $0x10] sm:$0xff]
        %v309 = vld [vmem:[#allocation5 + $0x18] sm:$0xff]
        %v310 = vld [vmem:[#allocation5 + $0x20] sm:$0xff]
        %v311 = vld [vmem:[#allocation5 + $0x28] sm:$0xff]
        %v312 = vld [vmem:[#allocation5 + $0x30] sm:$0xff]
        %v313 = vld [vmem:[#allocation5 + $0x38] sm:$0xff]
        %v314 = vld [vmem:[#allocation5 + $0x40] sm:$0xff]
        %v315 = vld [vmem:[#allocation5 + $0x48] sm:$0xff]
        %v316 = vld [vmem:[#allocation5 + $0x50] sm:$0xff]
        %v317 = vld [vmem:[#allocation5 + $0x58] sm:$0xff]
        %v318 = vld [vmem:[#allocation5 + $0x60] sm:$0xff]
        %v319 = vld [vmem:[#allocation5 + $0x68] sm:$0xff]
        %v320 = vld [vmem:[#allocation5 + $0x70] sm:$0xff]
        %v321 = vld [vmem:[#allocation5 + $0x78] sm:$0xff]
        %v322 = vld [vmem:[%s2] sm:$0x1]
        %v324 = vlaneseq
        %v325 = vshrl.u32 %v324, 7
        %v326 = vsub.s32 0, %v325
        %v327 = vrot.slane %v322, %v326
        %329 = vmatprep.subr.mxu0 0.0
        %330 = vmatpush1.msra.mxu0 %v321
        %331 = vmatprep.subr.mxu0 0.0
        %332 = vmatpush1.msra.mxu0 %v320
        %333 = vmatprep.subr.mxu0 0.0
        %334 = vmatpush1.msra.mxu0 %v319
        %335 = vmatprep.subr.mxu0 0.0
        %336 = vmatpush1.msra.mxu0 %v318
        %337 = vmatprep.subr.mxu0 0.0
        %338 = vmatpush1.msra.mxu0 %v317
        %339 = vmatprep.subr.mxu0 0.0
        %340 = vmatpush1.msra.mxu0 %v316
        %341 = vmatprep.subr.mxu0 0.0
        %342 = vmatpush1.msra.mxu0 %v315
        %343 = vmatprep.subr.mxu0 0.0
        %344 = vmatpush1.msra.mxu0 %v314
        %345 = vmatprep.subr.mxu0 0.0
        %346 = vmatpush1.msra.mxu0 %v313
        %347 = vmatprep.subr.mxu0 0.0
        %348 = vmatpush1.msra.mxu0 %v312
        %349 = vmatprep.subr.mxu0 0.0
        %350 = vmatpush1.msra.mxu0 %v311
        %351 = vmatprep.subr.mxu0 0.0
        %352 = vmatpush1.msra.mxu0 %v310
        %353 = vmatprep.subr.mxu0 0.0
        %354 = vmatpush1.msra.mxu0 %v309
        %355 = vmatprep.subr.mxu0 0.0
        %356 = vmatpush1.msra.mxu0 %v308
        %357 = vmatprep.subr.mxu0 0.0
        %358 = vmatpush1.msra.mxu0 %v307
        %359 = vmatprep.subr.mxu0 0.0
        %360 = vmatpush1.msra.mxu0 %v306
        %361 = vmatprep.subr.mxu0 0.0
        %362 = vmatpush2.msra.mxu0 0.0
        %363 = vmatprep.subr.mxu0 0.0
        %364 = vmatpush2.msra.mxu0 0.0
        %365 = vmatprep.subr.mxu0 0.0
        %366 = vmatpush2.msra.mxu0 0.0
        %367 = vmatprep.subr.mxu0 0.0
        %368 = vmatpush2.msra.mxu0 0.0
        %369 = vmatprep.subr.mxu0 0.0
        %370 = vmatpush2.msra.mxu0 0.0
        %371 = vmatprep.subr.mxu0 0.0
        %372 = vmatpush2.msra.mxu0 0.0
        %373 = vmatprep.subr.mxu0 0.0
        %374 = vmatpush2.msra.mxu0 0.0
        %375 = vmatprep.subr.mxu0 0.0
        %376 = vmatpush2.msra.mxu0 0.0
        %377 = vmatprep.subr.mxu0 0.0
        %378 = vmatpush2.msra.mxu0 0.0
        %379 = vmatprep.subr.mxu0 0.0
        %380 = vmatpush2.msra.mxu0 0.0
        %381 = vmatprep.subr.mxu0 0.0
        %382 = vmatpush2.msra.mxu0 0.0
        %383 = vmatprep.subr.mxu0 0.0
        %384 = vmatpush2.msra.mxu0 0.0
        %385 = vmatprep.subr.mxu0 0.0
        %386 = vmatpush2.msra.mxu0 0.0
        %387 = vmatprep.subr.mxu0 0.0
        %388 = vmatpush2.msra.mxu0 0.0
        %389 = vmatprep.subr.mxu0 0.0
        %390 = vmatpush2.msra.mxu0 0.0
        %391 = vmatprep.subr.mxu0 0.0
        %392 = vmatpush2.msra.mxu0 0.0
        %393 = vmatprep.mubr.f32.mxu0 0.0
        %394 = vmatmul.mubr.f32.gmra.mxu0 %v274
        %v395 = vpop.f32.mrf.mxu0
        %v396 = vadd.f32 %v327, %v395
        %v397 = vpop.f32.mrf.mxu0
        %398 = vmatprep.mubr.f32.mxu0 0.0
        %399 = vmatmul.mubr.f32.gmra.mxu0 %v275
        %v400 = vpop.f32.mrf.mxu0
        %v401 = vadd.f32 %v327, %v400
        %v402 = vpop.f32.mrf.mxu0
        %403 = vmatprep.mubr.f32.mxu0 0.0
        %404 = vmatmul.mubr.f32.gmra.mxu0 %v276
        %v405 = vpop.f32.mrf.mxu0
        %v406 = vadd.f32 %v327, %v405
        %v407 = vpop.f32.mrf.mxu0
        %408 = vmatprep.mubr.f32.mxu0 0.0
        %409 = vmatmul.mubr.f32.gmra.mxu0 %v277
        %v410 = vpop.f32.mrf.mxu0
        %v411 = vadd.f32 %v327, %v410
        %v412 = vpop.f32.mrf.mxu0
        %413 = vmatprep.mubr.f32.mxu0 0.0
        %414 = vmatmul.mubr.f32.gmra.mxu0 %v278
        %v415 = vpop.f32.mrf.mxu0
        %v416 = vadd.f32 %v327, %v415
        %v417 = vpop.f32.mrf.mxu0
        %418 = vmatprep.mubr.f32.mxu0 0.0
        %419 = vmatmul.mubr.f32.gmra.mxu0 %v279
        %v420 = vpop.f32.mrf.mxu0
        %v421 = vadd.f32 %v327, %v420
        %v422 = vpop.f32.mrf.mxu0
        %423 = vmatprep.mubr.f32.mxu0 0.0
        %424 = vmatmul.mubr.f32.gmra.mxu0 %v280
        %v425 = vpop.f32.mrf.mxu0
        %v426 = vadd.f32 %v327, %v425
        %v427 = vpop.f32.mrf.mxu0
        %428 = vmatprep.mubr.f32.mxu0 0.0
        %429 = vmatmul.mubr.f32.gmra.mxu0 %v281
        %v430 = vpop.f32.mrf.mxu0
        %v431 = vadd.f32 %v327, %v430
        %v432 = vpop.f32.mrf.mxu0
        %433 = vmatprep.mubr.f32.mxu0 0.0
        %434 = vmatmul.mubr.f32.gmra.mxu0 %v282
        %v435 = vpop.f32.mrf.mxu0
        %v436 = vadd.f32 %v327, %v435
        %v437 = vpop.f32.mrf.mxu0
        %438 = vmatprep.mubr.f32.mxu0 0.0
        %439 = vmatmul.mubr.f32.gmra.mxu0 %v283
        %v440 = vpop.f32.mrf.mxu0
        %v441 = vadd.f32 %v327, %v440
        %v442 = vpop.f32.mrf.mxu0
        %443 = vmatprep.mubr.f32.mxu0 0.0
        %444 = vmatmul.mubr.f32.gmra.mxu0 %v284
        %v445 = vpop.f32.mrf.mxu0
        %v446 = vadd.f32 %v327, %v445
        %v447 = vpop.f32.mrf.mxu0
        %448 = vmatprep.mubr.f32.mxu0 0.0
        %449 = vmatmul.mubr.f32.gmra.mxu0 %v285
        %v450 = vpop.f32.mrf.mxu0
        %v451 = vadd.f32 %v327, %v450
        %v452 = vpop.f32.mrf.mxu0
        %453 = vmatprep.mubr.f32.mxu0 0.0
        %454 = vmatmul.mubr.f32.gmra.mxu0 %v286
        %v455 = vpop.f32.mrf.mxu0
        %v456 = vadd.f32 %v327, %v455
        %v457 = vpop.f32.mrf.mxu0
        %458 = vmatprep.mubr.f32.mxu0 0.0
        %459 = vmatmul.mubr.f32.gmra.mxu0 %v287
        %v460 = vpop.f32.mrf.mxu0
        %v461 = vadd.f32 %v327, %v460
        %v462 = vpop.f32.mrf.mxu0
        %463 = vmatprep.mubr.f32.mxu0 0.0
        %464 = vmatmul.mubr.f32.gmra.mxu0 %v288
        %v465 = vpop.f32.mrf.mxu0
        %v466 = vadd.f32 %v327, %v465
        %v467 = vpop.f32.mrf.mxu0
        %468 = vmatprep.mubr.f32.mxu0 0.0
        %469 = vmatmul.mubr.f32.gmra.mxu0 %v289
        %v470 = vpop.f32.mrf.mxu0
        %v471 = vadd.f32 %v327, %v470
        %v472 = vpop.f32.mrf.mxu0
        %473 = vmatprep.mubr.f32.mxu0 0.0
        %474 = vmatmul.mubr.f32.gmra.mxu0 %v290
        %v475 = vpop.f32.mrf.mxu0
        %v476 = vadd.f32 %v327, %v475
        %v477 = vpop.f32.mrf.mxu0
        %478 = vmatprep.mubr.f32.mxu0 0.0
        %479 = vmatmul.mubr.f32.gmra.mxu0 %v291
        %v480 = vpop.f32.mrf.mxu0
        %v481 = vadd.f32 %v327, %v480
        %v482 = vpop.f32.mrf.mxu0
        %483 = vmatprep.mubr.f32.mxu0 0.0
        %484 = vmatmul.mubr.f32.gmra.mxu0 %v292
        %v485 = vpop.f32.mrf.mxu0
        %v486 = vadd.f32 %v327, %v485
        %v487 = vpop.f32.mrf.mxu0
        %488 = vmatprep.mubr.f32.mxu0 0.0
        %489 = vmatmul.mubr.f32.gmra.mxu0 %v293
        %v490 = vpop.f32.mrf.mxu0
        %v491 = vadd.f32 %v327, %v490
        %v492 = vpop.f32.mrf.mxu0
        %493 = vmatprep.mubr.f32.mxu0 0.0
        %494 = vmatmul.mubr.f32.gmra.mxu0 %v294
        %v495 = vpop.f32.mrf.mxu0
        %v496 = vadd.f32 %v327, %v495
        %v497 = vpop.f32.mrf.mxu0
        %498 = vmatprep.mubr.f32.mxu0 0.0
        %499 = vmatmul.mubr.f32.gmra.mxu0 %v295
        %v500 = vpop.f32.mrf.mxu0
        %v501 = vadd.f32 %v327, %v500
        %v502 = vpop.f32.mrf.mxu0
        %503 = vmatprep.mubr.f32.mxu0 0.0
        %504 = vmatmul.mubr.f32.gmra.mxu0 %v296
        %v505 = vpop.f32.mrf.mxu0
        %v506 = vadd.f32 %v327, %v505
        %v507 = vpop.f32.mrf.mxu0
        %508 = vmatprep.mubr.f32.mxu0 0.0
        %509 = vmatmul.mubr.f32.gmra.mxu0 %v297
        %v510 = vpop.f32.mrf.mxu0
        %v511 = vadd.f32 %v327, %v510
        %v512 = vpop.f32.mrf.mxu0
        %513 = vmatprep.mubr.f32.mxu0 0.0
        %514 = vmatmul.mubr.f32.gmra.mxu0 %v298
        %v515 = vpop.f32.mrf.mxu0
        %v516 = vadd.f32 %v327, %v515
        %v517 = vpop.f32.mrf.mxu0
        %518 = vmatprep.mubr.f32.mxu0 0.0
        %519 = vmatmul.mubr.f32.gmra.mxu0 %v299
        %v520 = vpop.f32.mrf.mxu0
        %v521 = vadd.f32 %v327, %v520
        %v522 = vpop.f32.mrf.mxu0
        %523 = vmatprep.mubr.f32.mxu0 0.0
        %524 = vmatmul.mubr.f32.gmra.mxu0 %v300
        %v525 = vpop.f32.mrf.mxu0
        %v526 = vadd.f32 %v327, %v525
        %v527 = vpop.f32.mrf.mxu0
        %528 = vmatprep.mubr.f32.mxu0 0.0
        %529 = vmatmul.mubr.f32.gmra.mxu0 %v301
        %v530 = vpop.f32.mrf.mxu0
        %v531 = vadd.f32 %v327, %v530
        %v532 = vpop.f32.mrf.mxu0
        %533 = vmatprep.mubr.f32.mxu0 0.0
        %534 = vmatmul.mubr.f32.gmra.mxu0 %v302
        %v535 = vpop.f32.mrf.mxu0
        %v536 = vadd.f32 %v327, %v535
        %v537 = vpop.f32.mrf.mxu0
        %538 = vmatprep.mubr.f32.mxu0 0.0
        %539 = vmatmul.mubr.f32.gmra.mxu0 %v303
        %v540 = vpop.f32.mrf.mxu0
        %v541 = vadd.f32 %v327, %v540
        %v542 = vpop.f32.mrf.mxu0
        %543 = vmatprep.mubr.f32.mxu0 0.0
        %544 = vmatmul.mubr.f32.gmra.mxu0 %v304
        %v545 = vpop.f32.mrf.mxu0
        %v546 = vadd.f32 %v327, %v545
        %v547 = vpop.f32.mrf.mxu0
        %548 = vmatprep.mubr.f32.mxu0 0.0
        %549 = vmatmul.mubr.f32.gmra.mxu0 %v305
        %v550 = vpop.f32.mrf.mxu0
        %v551 = vadd.f32 %v327, %v550
        %v552 = vpop.f32.mrf.mxu0
        %553 = vdwg.mxu0
        %v554 = vmax.f32 %v396, 0.0
        %v555 = vmax.f32 %v401, 0.0
        %v556 = vmax.f32 %v406, 0.0
        %v557 = vmax.f32 %v411, 0.0
        %v558 = vmax.f32 %v416, 0.0
        %v559 = vmax.f32 %v421, 0.0
        %v560 = vmax.f32 %v426, 0.0
        %v561 = vmax.f32 %v431, 0.0
        %v562 = vmax.f32 %v436, 0.0
        %v563 = vmax.f32 %v441, 0.0
        %v564 = vmax.f32 %v446, 0.0
        %v565 = vmax.f32 %v451, 0.0
        %v566 = vmax.f32 %v456, 0.0
        %v567 = vmax.f32 %v461, 0.0
        %v568 = vmax.f32 %v466, 0.0
        %v569 = vmax.f32 %v471, 0.0
        %v570 = vmax.f32 %v476, 0.0
        %v571 = vmax.f32 %v481, 0.0
        %v572 = vmax.f32 %v486, 0.0
        %v573 = vmax.f32 %v491, 0.0
        %v574 = vmax.f32 %v496, 0.0
        %v575 = vmax.f32 %v501, 0.0
        %v576 = vmax.f32 %v506, 0.0
        %v577 = vmax.f32 %v511, 0.0
        %v578 = vmax.f32 %v516, 0.0
        %v579 = vmax.f32 %v521, 0.0
        %v580 = vmax.f32 %v526, 0.0
        %v581 = vmax.f32 %v531, 0.0
        %v582 = vmax.f32 %v536, 0.0
        %v583 = vmax.f32 %v541, 0.0
        %v584 = vmax.f32 %v546, 0.0
        %v585 = vmax.f32 %v551, 0.0
        %v586 = vld [vmem:[#allocation7] sm:$0xff]
        %v587 = vld [vmem:[#allocation7 + $0x8] sm:$0xff]
        %v588 = vld [vmem:[#allocation7 + $0x10] sm:$0xff]
        %v589 = vld [vmem:[#allocation7 + $0x18] sm:$0xff]
        %v590 = vld [vmem:[#allocation7 + $0x20] sm:$0xff]
        %v591 = vld [vmem:[#allocation7 + $0x28] sm:$0xff]
        %v592 = vld [vmem:[#allocation7 + $0x30] sm:$0xff]
        %v593 = vld [vmem:[#allocation7 + $0x38] sm:$0xff]
        %v594 = vld [vmem:[#allocation7 + $0x40] sm:$0xff]
        %v595 = vld [vmem:[#allocation7 + $0x48] sm:$0xff]
        %v596 = vld [vmem:[#allocation7 + $0x50] sm:$0xff]
        %v597 = vld [vmem:[#allocation7 + $0x58] sm:$0xff]
        %v598 = vld [vmem:[#allocation7 + $0x60] sm:$0xff]
        %v599 = vld [vmem:[#allocation7 + $0x68] sm:$0xff]
        %v600 = vld [vmem:[#allocation7 + $0x70] sm:$0xff]
        %v601 = vld [vmem:[#allocation7 + $0x78] sm:$0xff]
        %v602 = vld [vmem:[%s4] sm:$0x1]
        %v604 = vlaneseq
        %v605 = vshrl.u32 %v604, 7
        %v606 = vsub.s32 0, %v605
        %v607 = vrot.slane %v602, %v606
        %609 = vmatprep.subr.mxu0 0.0
        %610 = vmatpush1.msra.mxu0 %v601
        %611 = vmatprep.subr.mxu0 0.0
        %612 = vmatpush1.msra.mxu0 %v600
        %613 = vmatprep.subr.mxu0 0.0
        %614 = vmatpush1.msra.mxu0 %v599
        %615 = vmatprep.subr.mxu0 0.0
        %616 = vmatpush1.msra.mxu0 %v598
        %617 = vmatprep.subr.mxu0 0.0
        %618 = vmatpush1.msra.mxu0 %v597
        %619 = vmatprep.subr.mxu0 0.0
        %620 = vmatpush1.msra.mxu0 %v596
        %621 = vmatprep.subr.mxu0 0.0
        %622 = vmatpush1.msra.mxu0 %v595
        %623 = vmatprep.subr.mxu0 0.0
        %624 = vmatpush1.msra.mxu0 %v594
        %625 = vmatprep.subr.mxu0 0.0
        %626 = vmatpush1.msra.mxu0 %v593
        %627 = vmatprep.subr.mxu0 0.0
        %628 = vmatpush1.msra.mxu0 %v592
        %629 = vmatprep.subr.mxu0 0.0
        %630 = vmatpush1.msra.mxu0 %v591
        %631 = vmatprep.subr.mxu0 0.0
        %632 = vmatpush1.msra.mxu0 %v590
        %633 = vmatprep.subr.mxu0 0.0
        %634 = vmatpush1.msra.mxu0 %v589
        %635 = vmatprep.subr.mxu0 0.0
        %636 = vmatpush1.msra.mxu0 %v588
        %637 = vmatprep.subr.mxu0 0.0
        %638 = vmatpush1.msra.mxu0 %v587
        %639 = vmatprep.subr.mxu0 0.0
        %640 = vmatpush1.msra.mxu0 %v586
        %641 = vmatprep.subr.mxu0 0.0
        %642 = vmatpush2.msra.mxu0 0.0
        %643 = vmatprep.subr.mxu0 0.0
        %644 = vmatpush2.msra.mxu0 0.0
        %645 = vmatprep.subr.mxu0 0.0
        %646 = vmatpush2.msra.mxu0 0.0
        %647 = vmatprep.subr.mxu0 0.0
        %648 = vmatpush2.msra.mxu0 0.0
        %649 = vmatprep.subr.mxu0 0.0
        %650 = vmatpush2.msra.mxu0 0.0
        %651 = vmatprep.subr.mxu0 0.0
        %652 = vmatpush2.msra.mxu0 0.0
        %653 = vmatprep.subr.mxu0 0.0
        %654 = vmatpush2.msra.mxu0 0.0
        %655 = vmatprep.subr.mxu0 0.0
        %656 = vmatpush2.msra.mxu0 0.0
        %657 = vmatprep.subr.mxu0 0.0
        %658 = vmatpush2.msra.mxu0 0.0
        %659 = vmatprep.subr.mxu0 0.0
        %660 = vmatpush2.msra.mxu0 0.0
        %661 = vmatprep.subr.mxu0 0.0
        %662 = vmatpush2.msra.mxu0 0.0
        %663 = vmatprep.subr.mxu0 0.0
        %664 = vmatpush2.msra.mxu0 0.0
        %665 = vmatprep.subr.mxu0 0.0
        %666 = vmatpush2.msra.mxu0 0.0
        %667 = vmatprep.subr.mxu0 0.0
        %668 = vmatpush2.msra.mxu0 0.0
        %669 = vmatprep.subr.mxu0 0.0
        %670 = vmatpush2.msra.mxu0 0.0
        %671 = vmatprep.subr.mxu0 0.0
        %672 = vmatpush2.msra.mxu0 0.0
        %673 = vmatprep.mubr.f32.mxu0 0.0
        %674 = vmatmul.mubr.f32.gmra.mxu0 %v554
        %v675 = vpop.f32.mrf.mxu0
        %v676 = vadd.f32 %v607, %v675
        %v677 = vpop.f32.mrf.mxu0
        %678 = vmatprep.mubr.f32.mxu0 0.0
        %679 = vmatmul.mubr.f32.gmra.mxu0 %v555
        %v680 = vpop.f32.mrf.mxu0
        %v681 = vadd.f32 %v607, %v680
        %v682 = vpop.f32.mrf.mxu0
        %683 = vmatprep.mubr.f32.mxu0 0.0
        %684 = vmatmul.mubr.f32.gmra.mxu0 %v556
        %v685 = vpop.f32.mrf.mxu0
        %v686 = vadd.f32 %v607, %v685
        %v687 = vpop.f32.mrf.mxu0
        %688 = vmatprep.mubr.f32.mxu0 0.0
        %689 = vmatmul.mubr.f32.gmra.mxu0 %v557
        %v690 = vpop.f32.mrf.mxu0
        %v691 = vadd.f32 %v607, %v690
        %v692 = vpop.f32.mrf.mxu0
        %693 = vmatprep.mubr.f32.mxu0 0.0
        %694 = vmatmul.mubr.f32.gmra.mxu0 %v558
        %v695 = vpop.f32.mrf.mxu0
        %v696 = vadd.f32 %v607, %v695
        %v697 = vpop.f32.mrf.mxu0
        %698 = vmatprep.mubr.f32.mxu0 0.0
        %699 = vmatmul.mubr.f32.gmra.mxu0 %v559
        %v700 = vpop.f32.mrf.mxu0
        %v701 = vadd.f32 %v607, %v700
        %v702 = vpop.f32.mrf.mxu0
        %703 = vmatprep.mubr.f32.mxu0 0.0
        %704 = vmatmul.mubr.f32.gmra.mxu0 %v560
        %v705 = vpop.f32.mrf.mxu0
        %v706 = vadd.f32 %v607, %v705
        %v707 = vpop.f32.mrf.mxu0
        %708 = vmatprep.mubr.f32.mxu0 0.0
        %709 = vmatmul.mubr.f32.gmra.mxu0 %v561
        %v710 = vpop.f32.mrf.mxu0
        %v711 = vadd.f32 %v607, %v710
        %v712 = vpop.f32.mrf.mxu0
        %713 = vmatprep.mubr.f32.mxu0 0.0
        %714 = vmatmul.mubr.f32.gmra.mxu0 %v562
        %v715 = vpop.f32.mrf.mxu0
        %v716 = vadd.f32 %v607, %v715
        %v717 = vpop.f32.mrf.mxu0
        %718 = vmatprep.mubr.f32.mxu0 0.0
        %719 = vmatmul.mubr.f32.gmra.mxu0 %v563
        %v720 = vpop.f32.mrf.mxu0
        %v721 = vadd.f32 %v607, %v720
        %v722 = vpop.f32.mrf.mxu0
        %723 = vmatprep.mubr.f32.mxu0 0.0
        %724 = vmatmul.mubr.f32.gmra.mxu0 %v564
        %v725 = vpop.f32.mrf.mxu0
        %v726 = vadd.f32 %v607, %v725
        %v727 = vpop.f32.mrf.mxu0
        %728 = vmatprep.mubr.f32.mxu0 0.0
        %729 = vmatmul.mubr.f32.gmra.mxu0 %v565
        %v730 = vpop.f32.mrf.mxu0
        %v731 = vadd.f32 %v607, %v730
        %v732 = vpop.f32.mrf.mxu0
        %733 = vmatprep.mubr.f32.mxu0 0.0
        %734 = vmatmul.mubr.f32.gmra.mxu0 %v566
        %v735 = vpop.f32.mrf.mxu0
        %v736 = vadd.f32 %v607, %v735
        %v737 = vpop.f32.mrf.mxu0
        %738 = vmatprep.mubr.f32.mxu0 0.0
        %739 = vmatmul.mubr.f32.gmra.mxu0 %v567
        %v740 = vpop.f32.mrf.mxu0
        %v741 = vadd.f32 %v607, %v740
        %v742 = vpop.f32.mrf.mxu0
        %743 = vmatprep.mubr.f32.mxu0 0.0
        %744 = vmatmul.mubr.f32.gmra.mxu0 %v568
        %v745 = vpop.f32.mrf.mxu0
        %v746 = vadd.f32 %v607, %v745
        %v747 = vpop.f32.mrf.mxu0
        %748 = vmatprep.mubr.f32.mxu0 0.0
        %749 = vmatmul.mubr.f32.gmra.mxu0 %v569
        %v750 = vpop.f32.mrf.mxu0
        %v751 = vadd.f32 %v607, %v750
        %v752 = vpop.f32.mrf.mxu0
        %753 = vmatprep.mubr.f32.mxu0 0.0
        %754 = vmatmul.mubr.f32.gmra.mxu0 %v570
        %v755 = vpop.f32.mrf.mxu0
        %v756 = vadd.f32 %v607, %v755
        %v757 = vpop.f32.mrf.mxu0
        %758 = vmatprep.mubr.f32.mxu0 0.0
        %759 = vmatmul.mubr.f32.gmra.mxu0 %v571
        %v760 = vpop.f32.mrf.mxu0
        %v761 = vadd.f32 %v607, %v760
        %v762 = vpop.f32.mrf.mxu0
        %763 = vmatprep.mubr.f32.mxu0 0.0
        %764 = vmatmul.mubr.f32.gmra.mxu0 %v572
        %v765 = vpop.f32.mrf.mxu0
        %v766 = vadd.f32 %v607, %v765
        %v767 = vpop.f32.mrf.mxu0
        %768 = vmatprep.mubr.f32.mxu0 0.0
        %769 = vmatmul.mubr.f32.gmra.mxu0 %v573
        %v770 = vpop.f32.mrf.mxu0
        %v771 = vadd.f32 %v607, %v770
        %v772 = vpop.f32.mrf.mxu0
        %773 = vmatprep.mubr.f32.mxu0 0.0
        %774 = vmatmul.mubr.f32.gmra.mxu0 %v574
        %v775 = vpop.f32.mrf.mxu0
        %v776 = vadd.f32 %v607, %v775
        %v777 = vpop.f32.mrf.mxu0
        %778 = vmatprep.mubr.f32.mxu0 0.0
        %779 = vmatmul.mubr.f32.gmra.mxu0 %v575
        %v780 = vpop.f32.mrf.mxu0
        %v781 = vadd.f32 %v607, %v780
        %v782 = vpop.f32.mrf.mxu0
        %783 = vmatprep.mubr.f32.mxu0 0.0
        %784 = vmatmul.mubr.f32.gmra.mxu0 %v576
        %v785 = vpop.f32.mrf.mxu0
        %v786 = vadd.f32 %v607, %v785
        %v787 = vpop.f32.mrf.mxu0
        %788 = vmatprep.mubr.f32.mxu0 0.0
        %789 = vmatmul.mubr.f32.gmra.mxu0 %v577
        %v790 = vpop.f32.mrf.mxu0
        %v791 = vadd.f32 %v607, %v790
        %v792 = vpop.f32.mrf.mxu0
        %793 = vmatprep.mubr.f32.mxu0 0.0
        %794 = vmatmul.mubr.f32.gmra.mxu0 %v578
        %v795 = vpop.f32.mrf.mxu0
        %v796 = vadd.f32 %v607, %v795
        %v797 = vpop.f32.mrf.mxu0
        %798 = vmatprep.mubr.f32.mxu0 0.0
        %799 = vmatmul.mubr.f32.gmra.mxu0 %v579
        %v800 = vpop.f32.mrf.mxu0
        %v801 = vadd.f32 %v607, %v800
        %v802 = vpop.f32.mrf.mxu0
        %803 = vmatprep.mubr.f32.mxu0 0.0
        %804 = vmatmul.mubr.f32.gmra.mxu0 %v580
        %v805 = vpop.f32.mrf.mxu0
        %v806 = vadd.f32 %v607, %v805
        %v807 = vpop.f32.mrf.mxu0
        %808 = vmatprep.mubr.f32.mxu0 0.0
        %809 = vmatmul.mubr.f32.gmra.mxu0 %v581
        %v810 = vpop.f32.mrf.mxu0
        %v811 = vadd.f32 %v607, %v810
        %v812 = vpop.f32.mrf.mxu0
        %813 = vmatprep.mubr.f32.mxu0 0.0
        %814 = vmatmul.mubr.f32.gmra.mxu0 %v582
        %v815 = vpop.f32.mrf.mxu0
        %v816 = vadd.f32 %v607, %v815
        %v817 = vpop.f32.mrf.mxu0
        %818 = vmatprep.mubr.f32.mxu0 0.0
        %819 = vmatmul.mubr.f32.gmra.mxu0 %v583
        %v820 = vpop.f32.mrf.mxu0
        %v821 = vadd.f32 %v607, %v820
        %v822 = vpop.f32.mrf.mxu0
        %823 = vmatprep.mubr.f32.mxu0 0.0
        %824 = vmatmul.mubr.f32.gmra.mxu0 %v584
        %v825 = vpop.f32.mrf.mxu0
        %v826 = vadd.f32 %v607, %v825
        %v827 = vpop.f32.mrf.mxu0
        %828 = vmatprep.mubr.f32.mxu0 0.0
        %829 = vmatmul.mubr.f32.gmra.mxu0 %v585
        %v830 = vpop.f32.mrf.mxu0
        %v831 = vadd.f32 %v607, %v830
        %v832 = vpop.f32.mrf.mxu0
        %833 = vdwg.mxu0
        %v834 = vadd.f32 %v676, %v274
        %v835 = vadd.f32 %v681, %v275
        %v836 = vadd.f32 %v686, %v276
        %v837 = vadd.f32 %v691, %v277
        %v838 = vadd.f32 %v696, %v278
        %v839 = vadd.f32 %v701, %v279
        %v840 = vadd.f32 %v706, %v280
        %v841 = vadd.f32 %v711, %v281
        %v842 = vadd.f32 %v716, %v282
        %v843 = vadd.f32 %v721, %v283
        %v844 = vadd.f32 %v726, %v284
        %v845 = vadd.f32 %v731, %v285
        %v846 = vadd.f32 %v736, %v286
        %v847 = vadd.f32 %v741, %v287
        %v848 = vadd.f32 %v746, %v288
        %v849 = vadd.f32 %v751, %v289
        %v850 = vadd.f32 %v756, %v290
        %v851 = vadd.f32 %v761, %v291
        %v852 = vadd.f32 %v766, %v292
        %v853 = vadd.f32 %v771, %v293
        %v854 = vadd.f32 %v776, %v294
        %v855 = vadd.f32 %v781, %v295
        %v856 = vadd.f32 %v786, %v296
        %v857 = vadd.f32 %v791, %v297
        %v858 = vadd.f32 %v796, %v298
        %v859 = vadd.f32 %v801, %v299
        %v860 = vadd.f32 %v806, %v300
        %v861 = vadd.f32 %v811, %v301
        %v862 = vadd.f32 %v816, %v302
        %v863 = vadd.f32 %v821, %v303
        %v864 = vadd.f32 %v826, %v304
        %v865 = vadd.f32 %v831, %v305
        %866 = vst [vmem:[%s271] sm:$0xff] %v834
        %867 = vst [vmem:[%s271 + $0x8] sm:$0xff] %v835
        %868 = vst [vmem:[%s271 + $0x10] sm:$0xff] %v836
        %869 = vst [vmem:[%s271 + $0x18] sm:$0xff] %v837
        %870 = vst [vmem:[%s271 + $0x20] sm:$0xff] %v838
        %871 = vst [vmem:[%s271 + $0x28] sm:$0xff] %v839
        %872 = vst [vmem:[%s271 + $0x30] sm:$0xff] %v840
        %873 = vst [vmem:[%s271 + $0x38] sm:$0xff] %v841
        %874 = vst [vmem:[%s271 + $0x40] sm:$0xff] %v842
        %875 = vst [vmem:[%s271 + $0x48] sm:$0xff] %v843
        %876 = vst [vmem:[%s271 + $0x50] sm:$0xff] %v844
        %877 = vst [vmem:[%s271 + $0x58] sm:$0xff] %v845
        %878 = vst [vmem:[%s271 + $0x60] sm:$0xff] %v846
        %879 = vst [vmem:[%s271 + $0x68] sm:$0xff] %v847
        %880 = vst [vmem:[%s271 + $0x70] sm:$0xff] %v848
        %881 = vst [vmem:[%s271 + $0x78] sm:$0xff] %v849
        %882 = vst [vmem:[%s271 + $0x80] sm:$0xff] %v850
        %883 = vst [vmem:[%s271 + $0x88] sm:$0xff] %v851
        %884 = vst [vmem:[%s271 + $0x90] sm:$0xff] %v852
        %885 = vst [vmem:[%s271 + $0x98] sm:$0xff] %v853
        %886 = vst [vmem:[%s271 + $0xa0] sm:$0xff] %v854
        %887 = vst [vmem:[%s271 + $0xa8] sm:$0xff] %v855
        %888 = vst [vmem:[%s271 + $0xb0] sm:$0xff] %v856
        %889 = vst [vmem:[%s271 + $0xb8] sm:$0xff] %v857
        %890 = vst [vmem:[%s271 + $0xc0] sm:$0xff] %v858
        %891 = vst [vmem:[%s271 + $0xc8] sm:$0xff] %v859
        %892 = vst [vmem:[%s271 + $0xd0] sm:$0xff] %v860
        %893 = vst [vmem:[%s271 + $0xd8] sm:$0xff] %v861
        %894 = vst [vmem:[%s271 + $0xe0] sm:$0xff] %v862
        %895 = vst [vmem:[%s271 + $0xe8] sm:$0xff] %v863
        %896 = vst [vmem:[%s271 + $0xf0] sm:$0xff] %v864
        %897 = vst [vmem:[%s271 + $0xf8] sm:$0xff] %v865
        %s898 = sand.u32 %s141, 1
        %s899 = scalar_lea.sflag [#allocation4], %s898
        %s900 = sand.u32 %s141, 1
        %s901 = smul.addr %s900, 256
        %s902 = scalar_lea.vmem [#allocation8], %s901
        // Predicated region
        $region53: #{tpu_custom_call.1} parent=39 // pred_check
          %p903 = pneg %p151
        $region54: #{tpu_custom_call.1} parent=39 // pred_check_branch
          %905 = sbr.rel (%p903) target = $region56
        $region55: #{tpu_custom_call.1} parent=39 // pred_region
          %s906 = smul.u32 32, %s23
          %s908 = ssub.s32 4096, 4096
          %909 = vsyncadd %s899, %s908
          %s910 = smul.addr %s906, 128
          %s911 = scalar_lea.hbm %s5, %s910
          %s912 = sshll.u32 %s902, 4
          %s913 = int_to_ptr.vmem [resolvable:$true] %s912
          %918 = dma.vmem_to_hbm [thread:$0]  %s913, 4096, %s911, %s899, 128, 128, 8
        $region56: #{tpu_custom_call.1} parent=39 // pred_fallthru
          _
      $region40: #{tpu_custom_call.1} parent=5 // pred_fallthru
        _
      %p919 = scmp.le.s32.totalorder 2, %s18
      // Predicated region
      $region57: #{tpu_custom_call.1} parent=5 // pred_check
        %p920 = pneg %p919
      $region58: #{tpu_custom_call.1} parent=5 // pred_check_branch
        %922 = sbr.rel (%p920) target = $region60
      $region59: #{tpu_custom_call.1} parent=5 // pred_region
        %s923 = ssub.s32 %s18, 2
        // Predicated region
        $region61: #{tpu_custom_call.1} parent=59 // pred_check
          %p924 = pneg %p157
        $region62: #{tpu_custom_call.1} parent=59 // pred_check_branch
          %926 = sbr.rel (%p924) target = $region64
        $region63: #{tpu_custom_call.1} parent=59 // pred_region
          %s927 = sand.u32 %s142, 1
          %s928 = scalar_lea.sflag [#allocation4], %s927
          %s929 = sand.u32 %s142, 1
          %s930 = smul.addr %s929, 256
          %s931 = scalar_lea.vmem [#allocation8], %s930
          %932 = dma.done %s928, 4096
        $region64: #{tpu_custom_call.1} parent=59 // pred_fallthru
          _
      $region60: #{tpu_custom_call.1} parent=5 // pred_fallthru
        _
    $region6: #{tpu_custom_call.1} parent=1 // loop_footer
      %s22 = sadd.s32 1, %s18
    $region7: #{tpu_custom_call.1} parent=1 // loop_footer_branch
      %17 = sbr.rel target = $region3
    $region8: #{tpu_custom_call.1} parent=1 // loop_exit
      _
    %933 = vsyncpa [#allocation3], 1
    %s934 = scalar_lea.sflag [#allocation3], 1
    %935 = vsyncpa %s934, 1
    %936 = vsyncpa [#allocation6], 1
    %937 = vsyncpa [#allocation4], 1
    %s938 = scalar_lea.sflag [#allocation4], 1
    %939 = vsyncpa %s938, 1

</llo_original>
